<compile_context>
chip_gen: v5e
topology: v5e:2x2
jax: 0.10.0
libtpu: 0.0.40
codegen_flags: <defaults>
</compile_context>

<pallas_src>
import jax
import jax.numpy as jnp
import numpy as np
from jax.experimental import pallas as pl
from jax.experimental.pallas import tpu as pltpu


def _pairwise_linear_kernel(s_ref, wlane_ref, sel_ref, o_ref):
    """s_ref: (rt, 128) scores flat view (native dtype);
    wlane_ref: (1, 128) f32 lane-tiled weights (w[l % G]);
    sel_ref: (128, P) bf16 {0,1} group-selection matrix (P = 128 // G);
    o_ref: (rt, P) f32 with out[r, j] = sum_g scores[P*r + j, g] * w[g]."""
    # Full-vreg VPU weighted products, exact in f32 (upcast happens in-register;
    # the HBM read stays at the native dtype).
    xw = s_ref[...].astype(jnp.float32) * wlane_ref[...]
    # Exact hi/lo bf16 split so the {0,1} compaction matmuls are exact regardless
    # of MXU precision mode: hi keeps the top 8 mantissa bits, lo the next 8;
    # dropped bits are ~2^-18 relative.
    hi = xw.astype(jnp.bfloat16)
    lo = (xw - hi.astype(jnp.float32)).astype(jnp.bfloat16)
    sel = sel_ref[...]
    o_ref[...] = (jnp.dot(hi, sel, preferred_element_type=jnp.float32)
                  + jnp.dot(lo, sel, preferred_element_type=jnp.float32))


def _row_tile(num_rows: int, itemsize: int, tile_bytes: int) -> int:
    """Rows (of 128 lanes) of the flat view per grid step."""
    if num_rows <= 32:
        return num_rows                                  # single full-extent block
    rt = max(32, tile_bytes // (128 * itemsize))         # ~tile_bytes per input tile
    rt = min(rt, pl.cdiv(num_rows, 4))                   # >=4 grid steps on large inputs (v7x megacore)
    return max(32, rt - rt % 32)                         # sublane-tile aligned for f32/bf16/int8


def pairwise_linear(scores: jax.Array, weight: jax.Array, *, tile_bytes: int = 4 * 1024 * 1024) -> jax.Array:
    """scores: [B, G], weight: [1, G] (or [G] / [G, 1]) -> [B, 1].

    Equivalent to PyTorch nn.Linear(num_graphs, 1, bias=False)(scores).
    """
    B, G = scores.shape
    w = jnp.reshape(weight, (G,)).astype(jnp.float32)

    if 128 % G != 0:
        # TODO(synk): lane-packed kernel assumes num_graphs divides 128 (true for the
        # pagerank recommender); fall back to XLA for other widths.
        return jnp.sum(scores.astype(jnp.float32) * w, axis=-1, keepdims=True).astype(scores.dtype)

    P = 128 // G                      # batches carried per 128-lane flat row

    # Only a ragged batch tail forces a pad (needed to form the flat view at all).
    B_pad = pl.cdiv(B, P) * P
    x = scores if B_pad == B else jnp.pad(scores, ((0, B_pad - B), (0, 0)))

    R = B_pad // P
    x_flat = x.reshape(R, 128)        # free: row-major regroup of [B_pad, G], no data movement

    # Lane-tiled weights and {0,1} group-selection matrix (tiny, stay resident in VMEM).
    lane = jnp.arange(128)
    w_lane = w[lane % G].reshape(1, 128)                                       # f32
    sel = (lane[:, None] // G == jnp.arange(P)[None, :]).astype(jnp.bfloat16)  # (128, P)

    rt = _row_tile(R, x_flat.dtype.itemsize, tile_bytes)
    grid = (pl.cdiv(R, rt),)          # partial final block handled by Pallas masking (no pad)

    out = pl.pallas_call(
        _pairwise_linear_kernel,
        out_shape=jax.ShapeDtypeStruct((R, P), jnp.float32),
        grid_spec=pltpu.PrefetchScalarGridSpec(
            num_scalar_prefetch=0,
            grid=grid,
            in_specs=[
                pl.BlockSpec((rt, 128), lambda i: (i, 0)),   # scores tile, native dtype
                pl.BlockSpec((1, 128), lambda i: (0, 0)),    # lane-tiled weights (resident)
                pl.BlockSpec((128, P), lambda i: (0, 0)),    # selection matrix (resident)
            ],
            out_specs=pl.BlockSpec((rt, P), lambda i: (i, 0)),
        ),
        compiler_params=pltpu.CompilerParams(
            dimension_semantics=("parallel",),   # row tiles independent -> megacore split on v7x
        ),
    )(x_flat, w_lane, sel)

    # Back to the module's [B, 1] output convention (free reshape; tiny slice if padded).
    return out.reshape(-1)[:B].reshape(B, 1).astype(scores.dtype)


if __name__ == "__main__":
    fn = jax.jit(pairwise_linear)
    key = jax.random.PRNGKey(0)

    # (batch, num_graphs): tiny smoke test, ragged multi-tile case, different group width.
    for batch, num_graphs in [(16, 8), (1000, 8), (96, 4)]:
        key, k_scores, k_w = jax.random.split(key, 3)
        scores = jax.random.normal(k_scores, (batch, num_graphs), dtype=jnp.float32)

        # nn.Linear(num_graphs, 1, bias=False): weight [1, num_graphs], U(-1/sqrt(in), 1/sqrt(in)).
        bound = float(num_graphs) ** -0.5
        weight = jax.random.uniform(
            k_w, (1, num_graphs), dtype=jnp.float32, minval=-bound, maxval=bound
        )

        out = jax.block_until_ready(fn(scores, weight))
        assert out.shape == (batch, 1)

        # Reference computed off-MXU in float64 (PyTorch forward is scores @ weight.T).
        ref = (np.asarray(scores, np.float64) @ np.asarray(weight, np.float64).T).astype(np.float32)
        assert np.allclose(np.asarray(out), ref, atol=1e-4, rtol=1e-4), (batch, num_graphs)

    print("KERNEL_OK")
</pallas_src>

<mosaic_0001>
module attributes {stable_mosaic.version = 11 : i64} {
  func.func @_pairwise_linear_kernel(%arg0: i32, %arg1: memref<1x128xf32, #tpu.memory_space<vmem>>, %arg2: memref<1x128xf32, #tpu.memory_space<vmem>>, %arg3: memref<128x16xbf16, #tpu.memory_space<vmem>>, %arg4: memref<1x16xf32, #tpu.memory_space<vmem>>) attributes {dimension_semantics = [#tpu.dimension_semantics<parallel>], iteration_bounds = array<i64: 1>, scalar_prefetch = 0 : i64, scratch_operands = 0 : i64, tpu.core_type = #tpu.core_type<tc>, window_params = [{transform_indices = @transform_0, window_bounds = array<i64: 1, 128>}, {pipeline_mode = #tpu.pipeline_mode<synchronous>, transform_indices = @transform_1, window_bounds = array<i64: 1, 128>}, {pipeline_mode = #tpu.pipeline_mode<synchronous>, transform_indices = @transform_2, window_bounds = array<i64: 128, 16>}, {transform_indices = @transform_3, window_bounds = array<i64: 1, 16>}]} {
    %c0 = arith.constant 0 : index
    %c0_0 = arith.constant 0 : index
    %0 = vector.load %arg1[%c0, %c0_0] : memref<1x128xf32, #tpu.memory_space<vmem>>, vector<1x128xf32>
    %c0_1 = arith.constant 0 : index
    %c0_2 = arith.constant 0 : index
    %1 = vector.load %arg2[%c0_1, %c0_2] : memref<1x128xf32, #tpu.memory_space<vmem>>, vector<1x128xf32>
    %2 = arith.mulf %0, %1 : vector<1x128xf32>
    %3 = arith.truncf %2 : vector<1x128xf32> to vector<1x128xbf16>
    %4 = arith.extf %3 : vector<1x128xbf16> to vector<1x128xf32>
    %5 = arith.subf %2, %4 : vector<1x128xf32>
    %6 = arith.truncf %5 : vector<1x128xf32> to vector<1x128xbf16>
    %c0_3 = arith.constant 0 : index
    %c0_4 = arith.constant 0 : index
    %7 = vector.load %arg3[%c0_3, %c0_4] : memref<128x16xbf16, #tpu.memory_space<vmem>>, vector<128x16xbf16>
    %cst = arith.constant dense<0.000000e+00> : vector<1x16xf32>
    %8 = tpu.matmul %3, %7, %cst {dimension_numbers = #tpu.dot_dimension_numbers<[1], [0], [0], [1], [0, 0, 1, 1], [], []>} : vector<1x128xbf16>, vector<128x16xbf16>, vector<1x16xf32> -> vector<1x16xf32>
    %cst_5 = arith.constant dense<0.000000e+00> : vector<1x16xf32>
    %9 = tpu.matmul %6, %7, %cst_5 {dimension_numbers = #tpu.dot_dimension_numbers<[1], [0], [0], [1], [0, 0, 1, 1], [], []>} : vector<1x128xbf16>, vector<128x16xbf16>, vector<1x16xf32> -> vector<1x16xf32>
    %10 = arith.addf %8, %9 : vector<1x16xf32>
    %c0_6 = arith.constant 0 : index
    %c0_7 = arith.constant 0 : index
    %11 = vector.load %arg4[%c0_6, %c0_7] : memref<1x16xf32, #tpu.memory_space<vmem>>, vector<1x16xf32>
    tpu.vector_store %arg4[%c0_6, %c0_7], %10 {strides = array<i32>} : memref<1x16xf32, #tpu.memory_space<vmem>>, vector<1x16xf32>,
    return
  }
  func.func @transform_0(%arg0: i32) -> (i32, i32) {
    %c0_i32 = arith.constant 0 : i32
    %c0_i32_0 = arith.constant 0 : i32
    return %arg0, %c0_i32 : i32, i32
  }
  func.func @transform_1(%arg0: i32) -> (i32, i32) {
    %c0_i32 = arith.constant 0 : i32
    %c0_i32_0 = arith.constant 0 : i32
    %c0_i32_1 = arith.constant 0 : i32
    return %c0_i32, %c0_i32_0 : i32, i32
  }
  func.func @transform_2(%arg0: i32) -> (i32, i32) {
    %c0_i32 = arith.constant 0 : i32
    %c0_i32_0 = arith.constant 0 : i32
    %c0_i32_1 = arith.constant 0 : i32
    return %c0_i32, %c0_i32_0 : i32, i32
  }
  func.func @transform_3(%arg0: i32) -> (i32, i32) {
    %c0_i32 = arith.constant 0 : i32
    %c0_i32_0 = arith.constant 0 : i32
    return %arg0, %c0_i32 : i32, i32
  }
}

</mosaic_0001>

<llo_original>
// kernel: pairwise_linear.1
$region0: #{pairwise_linear.1}
  #allocation0 [shape = 'u32[]', space=smem, size = 0x4, offset = 0x4, fixed_abs, tag = 'smem constant byte address 0x4 - core index']
  #allocation1 [shape = 'u32[72,128]{1,0:T(1,128)}', space=vmem, size = 0x9000, scoped, tag = 'internal scratch']
  %s0 = inlined_call_operand.vmem [shape: f32[1,128], index: 0, kind: input, shape index: {}]
  %s1 = inlined_call_operand.vmem [shape: f32[1,128], index: 1, kind: input, shape index: {}]
  %s2 = inlined_call_operand.vmem [shape: bf16[128,16], index: 2, kind: input, shape index: {}]
  %s3 = inlined_call_operand.hbm [shape: f32[1,16], index: 3, kind: output, shape index: {}]
  %s4 = sld [smem:[#allocation0]]
  $region22: #{pairwise_linear.1} parent=0
    _
  %s6 = ssub.s32 1, %s4
  %s7 = scalar_select 0, %s6, %s4
  $region1: #{pairwise_linear.1} parent=0
    #allocation2 [shape = 'u8[512]{0}', space=vmem, size = 0x400, scoped, tag = 'output window, operand 0, single buffered']
    #allocation3 [shape = 's32[1]{0}', space=sflag, size = 0x4, scoped, tag = 'scoped memory for pairwise_linear.1']
    %8 = vsyncpa [#allocation3], 0
    // Predicated region
    $region2: #{pairwise_linear.1} parent=1 // pred_check
      _
    $region3: #{pairwise_linear.1} parent=1 // pred_check_branch
      %10 = sbr.rel (0) target = $region5
    $region4: #{pairwise_linear.1} parent=1 // pred_region
      _
    $region5: #{pairwise_linear.1} parent=1 // pred_fallthru
      _
    // Predicated region
    $region6: #{pairwise_linear.1} parent=1 // pred_check
      _
    $region7: #{pairwise_linear.1} parent=1 // pred_check_branch
      %12 = sbr.rel (0) target = $region9
    $region8: #{pairwise_linear.1} parent=1 // pred_region
      _
    $region9: #{pairwise_linear.1} parent=1 // pred_fallthru
      _
    // Predicated region
    $region10: #{pairwise_linear.1} parent=1 // pred_check
      _
    $region11: #{pairwise_linear.1} parent=1 // pred_check_branch
      %14 = sbr.rel (0) target = $region13
    $region12: #{pairwise_linear.1} parent=1 // pred_region
      _
    $region13: #{pairwise_linear.1} parent=1 // pred_fallthru
      _
    %v15 = vld [vmem:[%s0] sm:$0x1]
    %v16 = vld [vmem:[%s1] sm:$0x1]
    %v17 = vmul.f32 %v15, %v16
    %v18 = vpack.c.bf16 %v17, %v17
    %v19 = vunpack.c.l.bf16 %v18
    %v20 = vsub.f32 %v17, %v19
    %v21 = vpack.c.bf16 %v20, %v20
    %v22 = vld [vmem:[%s2] sm:$0xf]
    %v23 = vld [vmem:[%s2 + $0x4] sm:$0xf]
    %v24 = vld [vmem:[%s2 + $0x8] sm:$0xf]
    %v25 = vld [vmem:[%s2 + $0xc] sm:$0xf]
    %v26 = vld [vmem:[%s2 + $0x10] sm:$0xf]
    %v27 = vld [vmem:[%s2 + $0x14] sm:$0xf]
    %v28 = vld [vmem:[%s2 + $0x18] sm:$0xf]
    %v29 = vld [vmem:[%s2 + $0x1c] sm:$0xf]
    %v30 = vld [vmem:[%s2 + $0x20] sm:$0xf]
    %v31 = vld [vmem:[%s2 + $0x24] sm:$0xf]
    %v32 = vld [vmem:[%s2 + $0x28] sm:$0xf]
    %v33 = vld [vmem:[%s2 + $0x2c] sm:$0xf]
    %v34 = vld [vmem:[%s2 + $0x30] sm:$0xf]
    %v35 = vld [vmem:[%s2 + $0x34] sm:$0xf]
    %v36 = vld [vmem:[%s2 + $0x38] sm:$0xf]
    %v37 = vld [vmem:[%s2 + $0x3c] sm:$0xf]
    %v54 = vunpack.c.l.b16 %v22
    %v55 = vunpack.c.l.b16 %v23
    %v56 = vunpack.c.l.b16 %v24
    %v57 = vunpack.c.l.b16 %v25
    %v58 = vunpack.c.l.b16 %v26
    %v59 = vunpack.c.l.b16 %v27
    %v60 = vunpack.c.l.b16 %v28
    %v61 = vunpack.c.l.b16 %v29
    %v62 = vunpack.c.l.b16 %v30
    %v63 = vunpack.c.l.b16 %v31
    %v64 = vunpack.c.l.b16 %v32
    %v65 = vunpack.c.l.b16 %v33
    %v66 = vunpack.c.l.b16 %v34
    %v67 = vunpack.c.l.b16 %v35
    %v68 = vunpack.c.l.b16 %v36
    %v69 = vunpack.c.l.b16 %v37
    %v70 = vpack.c.b16 %v55, %v54
    %v71 = vpack.c.b16 %v57, %v56
    %v72 = vpack.c.b16 %v59, %v58
    %v73 = vpack.c.b16 %v61, %v60
    %v74 = vpack.c.b16 %v63, %v62
    %v75 = vpack.c.b16 %v65, %v64
    %v76 = vpack.c.b16 %v67, %v66
    %v77 = vpack.c.b16 %v69, %v68
    %86 = vmatpush.bf16.msra.mxu0 %v77
    %87 = vmatpush.bf16.msra.mxu0 %v76
    %88 = vmatpush.bf16.msra.mxu0 %v75
    %89 = vmatpush.bf16.msra.mxu0 %v74
    %90 = vmatpush.bf16.msra.mxu0 %v73
    %91 = vmatpush.bf16.msra.mxu0 %v72
    %92 = vmatpush.bf16.msra.mxu0 %v71
    %93 = vmatpush.bf16.msra.mxu0 %v70
    %94 = vmatmul.bf16.gmra.mxu0 %v21
    %v95 = vpop.f32.mrf.mxu0
    %v96 = vadd.f32 0.0, %v95
    %v97 = vpop.f32.mrf.mxu0
    %98 = vdwg.mxu0
    %99 = vmatpush.bf16.msra.mxu0 %v77
    %100 = vmatpush.bf16.msra.mxu0 %v76
    %101 = vmatpush.bf16.msra.mxu0 %v75
    %102 = vmatpush.bf16.msra.mxu0 %v74
    %103 = vmatpush.bf16.msra.mxu0 %v73
    %104 = vmatpush.bf16.msra.mxu0 %v72
    %105 = vmatpush.bf16.msra.mxu0 %v71
    %106 = vmatpush.bf16.msra.mxu0 %v70
    %107 = vmatmul.bf16.gmra.mxu0 %v18
    %v108 = vpop.f32.mrf.mxu0
    %v109 = vadd.f32 %v96, %v108
    %v110 = vpop.f32.mrf.mxu0
    %111 = vdwg.mxu0
    %vm112 = vcmask 122880
    %113 = vst.msk [vmem:[#allocation2] sm:$0x1] %vm112, %v109
    // Predicated region
    $region14: #{pairwise_linear.1} parent=1 // pred_check
      _
    $region15: #{pairwise_linear.1} parent=1 // pred_check_branch
      %115 = sbr.rel (0) target = $region17
    $region16: #{pairwise_linear.1} parent=1 // pred_region
      %117 = vsyncadd [#allocation3], 0
      %s119 = sshll.u32 [#allocation2], 4
      %s120 = int_to_ptr.vmem [resolvable:$true] %s119
      %s121 = sshll.u32 %s3, 4
      %s122 = int_to_ptr.hbm [resolvable:$true] %s121
      %124 = dma.vmem_to_hbm [thread:$0]  %s120, 16, %s122, [#allocation3]
    $region17: #{pairwise_linear.1} parent=1 // pred_fallthru
      _
    // Predicated region
    $region18: #{pairwise_linear.1} parent=1 // pred_check
      _
    $region19: #{pairwise_linear.1} parent=1 // pred_check_branch
      %126 = sbr.rel (0) target = $region21
    $region20: #{pairwise_linear.1} parent=1 // pred_region
      %128 = dma.done [#allocation3], 16
    $region21: #{pairwise_linear.1} parent=1 // pred_fallthru
      _
    %129 = vsyncpa [#allocation3], 1

</llo_original>
